<compile_context>
chip_gen: v7x
topology: tpu7x:2x2x1
jax: 0.10.0
libtpu: 0.0.40
codegen_flags: <defaults>
</compile_context>

<pallas_src>
import jax
import jax.numpy as jnp
from jax.experimental import pallas as pl
from jax.experimental.pallas import tpu as pltpu


# ----------------------------------------------------------------------------
# Kernel: three lane-dense bf16 matmuls + fused f32 bias/ReLU epilogues
# ----------------------------------------------------------------------------
def audio_block_kernel(x_ref, wm_ref, tc_ref, l2_ref, bias_ref, o_ref):
    n_out = o_ref.shape[-1]                        # W*Co (128)

    bias = bias_ref[...]                           # (3, 2*W*Co), f32
    bm = bias[0:1, :]                              # shifts after the H-convs
    bt = bias[1:2, :]                              # shifts after the W-convs
    bl = bias[2:3, :n_out]                         # shift after the 1x1 conv

    x = x_ref[...]                                 # (TM, Kpad)  bf16

    # H-axis convs (3-tap & 5-tap branches fused): one im2col matmul.
    a = jnp.dot(x, wm_ref[...], preferred_element_type=jnp.float32)
    a = jnp.maximum(a + bm, 0.0)                   # (TM, 2*W*Co)  f32

    # W-axis convs: band-matrix matmul, block-diagonal over the two branches.
    t = jnp.dot(a.astype(jnp.bfloat16), tc_ref[...],
                preferred_element_type=jnp.float32)
    t = jnp.maximum(t + bt, 0.0)                   # (TM, 2*W*Co)  f32

    # Branch add + 1x1 conv folded into one stacked matmul.
    y = jnp.dot(t.astype(jnp.bfloat16), l2_ref[...],
                preferred_element_type=jnp.float32)
    y = jnp.maximum(y + bl, 0.0)                   # (TM, W*Co)  lane-dense

    o_ref[...] = y.astype(o_ref.dtype)


# ----------------------------------------------------------------------------
# One-time operand construction (layout plumbing, hoisted out of the hot path)
# ----------------------------------------------------------------------------
def prepare_operands(p, W):
    Ci = p["w_m3"].shape[1]
    Co = p["w_m3"].shape[2]
    WCi, WCo = W * Ci, W * Co
    eyeW = jnp.eye(W, dtype=jnp.float32)

    # Fold eval-mode BN scale into the conv output channels.
    a3 = jnp.zeros((5, Ci, Co), jnp.float32).at[1:4].set(p["w_m3"] * p["s_m3"])
    a5 = p["w_m5"] * p["s_m5"]
    t3 = p["w_t3"] * p["s_t3"]
    t5 = p["w_t5"] * p["s_t5"]
    wl = p["w_last"] * p["s_last"]

    # H-conv weights for the im2col matmul, both branches fused:
    # rows = (tap k, w, ci), cols = (branch, w, co)   -> (5*W*Ci, 2*W*Co)
    part3 = jnp.einsum("kic,uw->kuiwc", a3, eyeW)      # (5, W, Ci, W, Co)
    part5 = jnp.einsum("kic,uw->kuiwc", a5, eyeW)
    wm = jnp.stack([part3, part5], axis=3).reshape(5 * WCi, 2 * WCo)

    # Pad the im2col K dimension up to a multiple of 128 lanes.
    k_raw = 5 * WCi
    k_pad = -(-k_raw // 128) * 128
    if k_pad > k_raw:
        wm = jnp.pad(wm, ((0, k_pad - k_raw), (0, 0)))

    # W-conv band matrices (same-padding along W), block-diag over branches.
    def band(wt, pad):
        K = wt.shape[0]
        d = jnp.arange(W)[:, None] - jnp.arange(W)[None, :]        # u - w
        S = (d[None, :, :] == (jnp.arange(K) - pad)[:, None, None])
        return jnp.einsum("kuw,kic->uiwc", S.astype(jnp.float32),
                          wt).reshape(WCo, WCo)

    T3 = band(t3, 1)
    T5 = band(t5, 2)
    tc = jnp.zeros((2 * WCo, 2 * WCo), jnp.float32)
    tc = tc.at[:WCo, :WCo].set(T3).at[WCo:, WCo:].set(T5)

    # 1x1 conv; the branch add is folded in by stacking the block twice.
    lblk = jnp.einsum("uw,ic->uiwc", eyeW, wl).reshape(WCo, WCo)
    l2 = jnp.concatenate([lblk, lblk], axis=0)                     # (2*W*Co, W*Co)

    # BN shifts, tiled over W, packed into one array: (3, 2*W*Co)
    bm = jnp.concatenate([jnp.tile(p["b_m3"], W), jnp.tile(p["b_m5"], W)])
    bt = jnp.concatenate([jnp.tile(p["b_t3"], W), jnp.tile(p["b_t5"], W)])
    bl = jnp.concatenate([jnp.tile(p["b_last"], W),
                          jnp.zeros((WCo,), jnp.float32)])
    bias = jnp.stack([bm, bt, bl], axis=0)

    return {
        "wm": wm.astype(jnp.bfloat16),     # (Kpad, 2*W*Co)
        "tc": tc.astype(jnp.bfloat16),     # (2*W*Co, 2*W*Co)
        "l2": l2.astype(jnp.bfloat16),     # (2*W*Co, W*Co)
        "bias": bias,                      # (3, 2*W*Co) f32
    }


def build_x_cols(x_nhwc, k_pad, K=5):
    """Zero-pad along H once and build the flattened im2col slab (B*H, Kpad)."""
    B, H, W, Ci = x_nhwc.shape
    pad = K // 2
    xp = jnp.pad(x_nhwc, ((0, 0), (pad, pad), (0, 0), (0, 0)))
    xp = xp.reshape(B, H + 2 * pad, W * Ci)
    cols = jnp.concatenate([xp[:, k:k + H, :] for k in range(K)], axis=-1)
    cols = cols.reshape(B * H, K * W * Ci)
    if k_pad > cols.shape[-1]:
        cols = jnp.pad(cols, ((0, 0), (0, k_pad - cols.shape[-1])))
    return cols.astype(jnp.bfloat16)


def _row_tile(M):
    """Rows per grid step: >=2 steps (both v7x TensorCores), <=256 rows."""
    tm = max(8, min(256, -(-M // 2)))      # ceil(M/2), clamped to [8, 256]
    return -(-tm // 8) * 8                 # round up to sublane multiple


def audio_block(x_nhwc, ops):
    B, H, W, Ci = x_nhwc.shape
    WCo = ops["l2"].shape[-1]
    Co = WCo // W
    k_pad = ops["wm"].shape[0]

    x_cols = build_x_cols(x_nhwc, k_pad)            # (B*H, Kpad) bf16
    M = B * H
    tm = _row_tile(M)
    grid = pl.cdiv(M, tm)
    m_pad = grid * tm
    if m_pad > M:
        x_cols = jnp.pad(x_cols, ((0, m_pad - M), (0, 0)))

    out = pl.pallas_call(
        audio_block_kernel,
        out_shape=jax.ShapeDtypeStruct((m_pad, WCo), jnp.float32),
        grid=(grid,),
        in_specs=[
            pl.BlockSpec((tm, k_pad), lambda i: (i, 0)),
            pl.BlockSpec(ops["wm"].shape, lambda i: (0, 0)),
            pl.BlockSpec(ops["tc"].shape, lambda i: (0, 0)),
            pl.BlockSpec(ops["l2"].shape, lambda i: (0, 0)),
            pl.BlockSpec(ops["bias"].shape, lambda i: (0, 0)),
        ],
        out_specs=pl.BlockSpec((tm, WCo), lambda i: (i, 0)),
        compiler_params=pltpu.CompilerParams(
            dimension_semantics=("parallel",)),
    )(x_cols, ops["wm"], ops["tc"], ops["l2"], ops["bias"])

    return out[:M].reshape(B, H, W, Co)


# ----------------------------------------------------------------------------
# Deterministic parameter construction (synthetic, no checkpoint)
# ----------------------------------------------------------------------------
def make_params(key, in_ch, out_ch, eps=0.001):
    keys = jax.random.split(key, 25)
    it = iter(keys)

    def conv_w(k, K, ci, co):
        # stored as (K, Ci, Co)  == PyTorch (Co, Ci, K) transposed
        return 0.1 * jax.random.normal(k, (K, ci, co), jnp.float32)

    def bn(kg, kb, km, kv, c):
        gamma = 1.0 + 0.1 * jax.random.normal(kg, (c,), jnp.float32)
        beta = 0.1 * jax.random.normal(kb, (c,), jnp.float32)
        mean = 0.1 * jax.random.normal(km, (c,), jnp.float32)
        var = jax.random.uniform(kv, (c,), jnp.float32, 0.5, 1.5)
        scale = gamma / jnp.sqrt(var + eps)
        shift = beta - mean * scale
        return scale, shift

    p = {}
    p["w_m3"] = conv_w(next(it), 3, in_ch, out_ch)
    p["w_t3"] = conv_w(next(it), 3, out_ch, out_ch)
    p["w_m5"] = conv_w(next(it), 5, in_ch, out_ch)
    p["w_t5"] = conv_w(next(it), 5, out_ch, out_ch)
    p["w_last"] = 0.1 * jax.random.normal(next(it), (out_ch, out_ch), jnp.float32)
    p["s_m3"], p["b_m3"] = bn(next(it), next(it), next(it), next(it), out_ch)
    p["s_t3"], p["b_t3"] = bn(next(it), next(it), next(it), next(it), out_ch)
    p["s_m5"], p["b_m5"] = bn(next(it), next(it), next(it), next(it), out_ch)
    p["s_t5"], p["b_t5"] = bn(next(it), next(it), next(it), next(it), out_ch)
    p["s_last"], p["b_last"] = bn(next(it), next(it), next(it), next(it), out_ch)
    return p


# ----------------------------------------------------------------------------
# Pure-JAX reference (NHWC, straightforward f32 convs) for the correctness check
# ----------------------------------------------------------------------------
def reference(x_nhwc, p):
    def conv(x, w, axis):
        K = w.shape[0]
        if axis == 0:   # along H (freq)
            wk = w.reshape(K, 1, w.shape[1], w.shape[2])
            pad = ((K // 2, K // 2), (0, 0))
        else:           # along W (time)
            wk = w.reshape(1, K, w.shape[1], w.shape[2])
            pad = ((0, 0), (K // 2, K // 2))
        return jax.lax.conv_general_dilated(
            x, wk, (1, 1), pad, dimension_numbers=("NHWC", "HWIO", "NHWC"))

    def bnr(y, s, b):
        return jnp.maximum(y * s + b, 0.0)

    x3 = bnr(conv(x_nhwc, p["w_m3"], 0), p["s_m3"], p["b_m3"])
    x3 = bnr(conv(x3, p["w_t3"], 1), p["s_t3"], p["b_t3"])
    x5 = bnr(conv(x_nhwc, p["w_m5"], 0), p["s_m5"], p["b_m5"])
    x5 = bnr(conv(x5, p["w_t5"], 1), p["s_t5"], p["b_t5"])
    xs = x3 + x5
    w1 = p["w_last"].reshape(1, 1, *p["w_last"].shape)
    y = jax.lax.conv_general_dilated(
        xs, w1, (1, 1), ((0, 0), (0, 0)),
        dimension_numbers=("NHWC", "HWIO", "NHWC"))
    return bnr(y, p["s_last"], p["b_last"])


# ----------------------------------------------------------------------------
if __name__ == "__main__":
    B, Ci, Co, H, W = 2, 4, 8, 16, 16
    key = jax.random.PRNGKey(0)
    kx, kp = jax.random.split(key)

    # PyTorch-style NCHW input, converted to the kernel's NHWC layout.
    x_nchw = jax.random.normal(kx, (B, Ci, H, W), jnp.float32)
    x_nhwc = jnp.transpose(x_nchw, (0, 2, 3, 1))

    params = make_params(kp, Ci, Co)

    # One-time weight folding (BN fold + block-diagonal assembly), hoisted
    # out of the per-call path.
    ops = prepare_operands(params, W)
    ops = jax.tree_util.tree_map(jax.block_until_ready, ops)

    audio_fn = jax.jit(audio_block)
    out = jax.block_until_ready(audio_fn(x_nhwc, ops))

    ref = jax.block_until_ready(reference(x_nhwc, params))
    assert out.shape == (B, H, W, Co)
    # bf16 operands through three matmuls -> loosened tolerance vs f32 reference.
    if not jnp.allclose(out, ref, rtol=3e-2, atol=3e-2):
        err = float(jnp.max(jnp.abs(out - ref)))
        raise AssertionError(
            f"Pallas kernel output mismatch vs reference (max abs err {err})")

    print("KERNEL_OK")
</pallas_src>

<mosaic_0001>
module attributes {stable_mosaic.version = 11 : i64} {
  func.func @audio_block_kernel(%arg0: i32, %arg1: memref<16x384xbf16, #tpu.memory_space<vmem>>, %arg2: memref<384x256xbf16, #tpu.memory_space<vmem>>, %arg3: memref<256x256xbf16, #tpu.memory_space<vmem>>, %arg4: memref<256x128xbf16, #tpu.memory_space<vmem>>, %arg5: memref<3x256xf32, #tpu.memory_space<vmem>>, %arg6: memref<16x128xf32, #tpu.memory_space<vmem>>) attributes {dimension_semantics = [#tpu.dimension_semantics<parallel>], iteration_bounds = array<i64: 2>, scalar_prefetch = 0 : i64, scratch_operands = 0 : i64, tpu.core_type = #tpu.core_type<tc>, window_params = [{transform_indices = @transform_0, window_bounds = array<i64: 16, 384>}, {pipeline_mode = #tpu.pipeline_mode<synchronous>, transform_indices = @transform_1, window_bounds = array<i64: 384, 256>}, {pipeline_mode = #tpu.pipeline_mode<synchronous>, transform_indices = @transform_2, window_bounds = array<i64: 256, 256>}, {pipeline_mode = #tpu.pipeline_mode<synchronous>, transform_indices = @transform_3, window_bounds = array<i64: 256, 128>}, {pipeline_mode = #tpu.pipeline_mode<synchronous>, transform_indices = @transform_4, window_bounds = array<i64: 3, 256>}, {transform_indices = @transform_5, window_bounds = array<i64: 16, 128>}]} {
    %c0 = arith.constant 0 : index
    %c0_0 = arith.constant 0 : index
    %0 = vector.load %arg5[%c0, %c0_0] : memref<3x256xf32, #tpu.memory_space<vmem>>, vector<3x256xf32>
    %1 = vector.extract_strided_slice %0 {offsets = [0, 0], sizes = [1, 256], strides = [1, 1]} : vector<3x256xf32> to vector<1x256xf32>
    %2 = vector.extract_strided_slice %0 {offsets = [1, 0], sizes = [1, 256], strides = [1, 1]} : vector<3x256xf32> to vector<1x256xf32>
    %3 = vector.extract_strided_slice %0 {offsets = [2, 0], sizes = [1, 128], strides = [1, 1]} : vector<3x256xf32> to vector<1x128xf32>
    %c0_1 = arith.constant 0 : index
    %c0_2 = arith.constant 0 : index
    %4 = vector.load %arg1[%c0_1, %c0_2] : memref<16x384xbf16, #tpu.memory_space<vmem>>, vector<16x384xbf16>
    %c0_3 = arith.constant 0 : index
    %c0_4 = arith.constant 0 : index
    %5 = vector.load %arg2[%c0_3, %c0_4] : memref<384x256xbf16, #tpu.memory_space<vmem>>, vector<384x256xbf16>
    %cst = arith.constant dense<0.000000e+00> : vector<16x256xf32>
    %6 = tpu.matmul %4, %5, %cst {dimension_numbers = #tpu.dot_dimension_numbers<[1], [0], [0], [1], [0, 0, 1, 1], [], []>} : vector<16x384xbf16>, vector<384x256xbf16>, vector<16x256xf32> -> vector<16x256xf32>
    %7 = vector.broadcast %1 : vector<1x256xf32> to vector<16x256xf32>
    %8 = arith.addf %6, %7 : vector<16x256xf32>
    %cst_5 = arith.constant 0.000000e+00 : f32
    %9 = vector.broadcast %cst_5 : f32 to vector<16x256xf32>
    %10 = arith.maximumf %8, %9 : vector<16x256xf32>
    %11 = arith.truncf %10 : vector<16x256xf32> to vector<16x256xbf16>
    %c0_6 = arith.constant 0 : index
    %c0_7 = arith.constant 0 : index
    %12 = vector.load %arg3[%c0_6, %c0_7] : memref<256x256xbf16, #tpu.memory_space<vmem>>, vector<256x256xbf16>
    %cst_8 = arith.constant dense<0.000000e+00> : vector<16x256xf32>
    %13 = tpu.matmul %11, %12, %cst_8 {dimension_numbers = #tpu.dot_dimension_numbers<[1], [0], [0], [1], [0, 0, 1, 1], [], []>} : vector<16x256xbf16>, vector<256x256xbf16>, vector<16x256xf32> -> vector<16x256xf32>
    %14 = vector.broadcast %2 : vector<1x256xf32> to vector<16x256xf32>
    %15 = arith.addf %13, %14 : vector<16x256xf32>
    %cst_9 = arith.constant 0.000000e+00 : f32
    %16 = vector.broadcast %cst_9 : f32 to vector<16x256xf32>
    %17 = arith.maximumf %15, %16 : vector<16x256xf32>
    %18 = arith.truncf %17 : vector<16x256xf32> to vector<16x256xbf16>
    %c0_10 = arith.constant 0 : index
    %c0_11 = arith.constant 0 : index
    %19 = vector.load %arg4[%c0_10, %c0_11] : memref<256x128xbf16, #tpu.memory_space<vmem>>, vector<256x128xbf16>
    %cst_12 = arith.constant dense<0.000000e+00> : vector<16x128xf32>
    %20 = tpu.matmul %18, %19, %cst_12 {dimension_numbers = #tpu.dot_dimension_numbers<[1], [0], [0], [1], [0, 0, 1, 1], [], []>} : vector<16x256xbf16>, vector<256x128xbf16>, vector<16x128xf32> -> vector<16x128xf32>
    %21 = vector.broadcast %3 : vector<1x128xf32> to vector<16x128xf32>
    %22 = arith.addf %20, %21 : vector<16x128xf32>
    %cst_13 = arith.constant 0.000000e+00 : f32
    %23 = vector.broadcast %cst_13 : f32 to vector<16x128xf32>
    %24 = arith.maximumf %22, %23 : vector<16x128xf32>
    %c0_14 = arith.constant 0 : index
    %c0_15 = arith.constant 0 : index
    %25 = vector.load %arg6[%c0_14, %c0_15] : memref<16x128xf32, #tpu.memory_space<vmem>>, vector<16x128xf32>
    tpu.vector_store %arg6[%c0_14, %c0_15], %24 {strides = array<i32>} : memref<16x128xf32, #tpu.memory_space<vmem>>, vector<16x128xf32>,
    return
  }
  func.func @transform_0(%arg0: i32) -> (i32, i32) {
    %c0_i32 = arith.constant 0 : i32
    %c0_i32_0 = arith.constant 0 : i32
    return %arg0, %c0_i32 : i32, i32
  }
  func.func @transform_1(%arg0: i32) -> (i32, i32) {
    %c0_i32 = arith.constant 0 : i32
    %c0_i32_0 = arith.constant 0 : i32
    %c0_i32_1 = arith.constant 0 : i32
    return %c0_i32, %c0_i32_0 : i32, i32
  }
  func.func @transform_2(%arg0: i32) -> (i32, i32) {
    %c0_i32 = arith.constant 0 : i32
    %c0_i32_0 = arith.constant 0 : i32
    %c0_i32_1 = arith.constant 0 : i32
    return %c0_i32, %c0_i32_0 : i32, i32
  }
  func.func @transform_3(%arg0: i32) -> (i32, i32) {
    %c0_i32 = arith.constant 0 : i32
    %c0_i32_0 = arith.constant 0 : i32
    %c0_i32_1 = arith.constant 0 : i32
    return %c0_i32, %c0_i32_0 : i32, i32
  }
  func.func @transform_4(%arg0: i32) -> (i32, i32) {
    %c0_i32 = arith.constant 0 : i32
    %c0_i32_0 = arith.constant 0 : i32
    %c0_i32_1 = arith.constant 0 : i32
    return %c0_i32, %c0_i32_0 : i32, i32
  }
  func.func @transform_5(%arg0: i32) -> (i32, i32) {
    %c0_i32 = arith.constant 0 : i32
    %c0_i32_0 = arith.constant 0 : i32
    return %arg0, %c0_i32 : i32, i32
  }
}

</mosaic_0001>

<llo_original>
// kernel: audio_block.1
$region0: #{audio_block.1}
  #allocation0 [shape = 'u32[]', space=smem, size = 0x4, offset = 0x4, fixed_abs, tag = 'smem constant byte address 0x4 - core index']
  #allocation1 [shape = 'u32[144,128]{1,0:T(1,128)}', space=vmem, size = 0x12000, scoped, tag = 'internal scratch']
  %s0 = inlined_call_operand.vmem [shape: bf16[32,384], index: 0, kind: input, shape index: {}]
  %s1 = inlined_call_operand.vmem [shape: bf16[384,256], index: 1, kind: input, shape index: {}]
  %s2 = inlined_call_operand.vmem [shape: bf16[256,256], index: 2, kind: input, shape index: {}]
  %s3 = inlined_call_operand.vmem [shape: bf16[256,128], index: 3, kind: input, shape index: {}]
  %s4 = inlined_call_operand.vmem [shape: f32[3,256], index: 4, kind: input, shape index: {}]
  %s5 = inlined_call_operand.vmem [shape: f32[32,128], index: 5, kind: output, shape index: {}]
  %s6 = sld [smem:[#allocation0]]
  $region53: #{audio_block.1} parent=0
    _
  %s8 = ssub.s32 1, %s6
  %s9 = scalar_select 0, %s8, %s6
  loop: start=0, step=1, limit=4
  $region2: #{audio_block.1} parent=0 // loop_pre_header
    _
  $region3: #{audio_block.1} parent=0 // loop_header
    %s11 = sphi 0, %s15
    %p12 = scmp.ge.s32.totalorder %s11, 4
    %s21 = sphi 0, %s23
    %s24 = sphi 0, %s21
    %s25 = sphi 0, %s24
    %s41 = sphi 0, %s25
    %s45 = sphi 0, %s45
    %s47 = sphi 0, %s45
    %s48 = sphi 0, %s47
    %s62 = sphi 0, %s48
    %s66 = sphi 0, %s66
    %s68 = sphi 0, %s66
    %s69 = sphi 0, %s68
    %s83 = sphi 0, %s69
    %s87 = sphi 0, %s87
    %s89 = sphi 0, %s87
    %s90 = sphi 0, %s89
    %s104 = sphi 0, %s90
    %s108 = sphi 0, %s108
    %s110 = sphi 0, %s108
    %s111 = sphi 0, %s110
    %s125 = sphi 0, %s111
    %s131 = sphi 0, %s133
    %s134 = sphi 0, %s131
    %s135 = sphi 0, %s134
    %s151 = sphi 0, %s135
  $region4: #{audio_block.1} parent=0 // loop_header_branch
    %14 = sbr.rel (%p12) target = $region8
  $region5: #{audio_block.1} parent=0 // loop_body
    %s16 = ssub.s32 %s11, 1
    %s17 = ssub.s32 %s11, 2
    %s18 = sadd.s32 %s11, 1
    %s19 = ssub.s32 %s11, %s18
    %p20 = scmp.eq.s32.totalorder %s19, 0
    %s22 = sadd.s32 %s21, 1
    %s23 = scalar_select %p20, %s21, %s22
    %p26 = pneg %p20
    %p27 = scmp.eq.s32.totalorder %s11, 1
    %p28 = por %p26, %p27
    %p29 = scmp.ne.s32.totalorder %s21, %s24
    %p30 = scmp.eq.s32.totalorder %s11, 0
    %p31 = por %p29, %p30
    %p32 = scmp.ne.s32.totalorder %s21, %s24
    %p33 = scmp.eq.s32.totalorder %s16, 1
    %p34 = por %p32, %p33
    %p35 = scmp.ne.s32.totalorder %s24, %s25
    %p36 = scmp.eq.s32.totalorder %s16, 0
    %p37 = por %p35, %p36
    %p38 = scmp.ne.s32.totalorder %s24, %s25
    %p39 = scmp.eq.s32.totalorder %s17, 1
    %p40 = por %p38, %p39
    %p42 = scmp.ne.s32.totalorder %s25, %s41
    %p43 = scmp.eq.s32.totalorder %s17, 0
    %p44 = por %p42, %p43
    %s46 = sadd.s32 %s45, 1
    %p49 = scmp.eq.s32.totalorder %s11, 1
    %p50 = scmp.ne.s32.totalorder %s45, %s47
    %p51 = scmp.eq.s32.totalorder %s11, 0
    %p52 = por %p50, %p51
    %p53 = scmp.ne.s32.totalorder %s45, %s47
    %p54 = scmp.eq.s32.totalorder %s16, 1
    %p55 = por %p53, %p54
    %p56 = scmp.ne.s32.totalorder %s47, %s48
    %p57 = scmp.eq.s32.totalorder %s16, 0
    %p58 = por %p56, %p57
    %p59 = scmp.ne.s32.totalorder %s47, %s48
    %p60 = scmp.eq.s32.totalorder %s17, 1
    %p61 = por %p59, %p60
    %p63 = scmp.ne.s32.totalorder %s48, %s62
    %p64 = scmp.eq.s32.totalorder %s17, 0
    %p65 = por %p63, %p64
    %s67 = sadd.s32 %s66, 1
    %p70 = scmp.eq.s32.totalorder %s11, 1
    %p71 = scmp.ne.s32.totalorder %s66, %s68
    %p72 = scmp.eq.s32.totalorder %s11, 0
    %p73 = por %p71, %p72
    %p74 = scmp.ne.s32.totalorder %s66, %s68
    %p75 = scmp.eq.s32.totalorder %s16, 1
    %p76 = por %p74, %p75
    %p77 = scmp.ne.s32.totalorder %s68, %s69
    %p78 = scmp.eq.s32.totalorder %s16, 0
    %p79 = por %p77, %p78
    %p80 = scmp.ne.s32.totalorder %s68, %s69
    %p81 = scmp.eq.s32.totalorder %s17, 1
    %p82 = por %p80, %p81
    %p84 = scmp.ne.s32.totalorder %s69, %s83
    %p85 = scmp.eq.s32.totalorder %s17, 0
    %p86 = por %p84, %p85
    %s88 = sadd.s32 %s87, 1
    %p91 = scmp.eq.s32.totalorder %s11, 1
    %p92 = scmp.ne.s32.totalorder %s87, %s89
    %p93 = scmp.eq.s32.totalorder %s11, 0
    %p94 = por %p92, %p93
    %p95 = scmp.ne.s32.totalorder %s87, %s89
    %p96 = scmp.eq.s32.totalorder %s16, 1
    %p97 = por %p95, %p96
    %p98 = scmp.ne.s32.totalorder %s89, %s90
    %p99 = scmp.eq.s32.totalorder %s16, 0
    %p100 = por %p98, %p99
    %p101 = scmp.ne.s32.totalorder %s89, %s90
    %p102 = scmp.eq.s32.totalorder %s17, 1
    %p103 = por %p101, %p102
    %p105 = scmp.ne.s32.totalorder %s90, %s104
    %p106 = scmp.eq.s32.totalorder %s17, 0
    %p107 = por %p105, %p106
    %s109 = sadd.s32 %s108, 1
    %p112 = scmp.eq.s32.totalorder %s11, 1
    %p113 = scmp.ne.s32.totalorder %s108, %s110
    %p114 = scmp.eq.s32.totalorder %s11, 0
    %p115 = por %p113, %p114
    %p116 = scmp.ne.s32.totalorder %s108, %s110
    %p117 = scmp.eq.s32.totalorder %s16, 1
    %p118 = por %p116, %p117
    %p119 = scmp.ne.s32.totalorder %s110, %s111
    %p120 = scmp.eq.s32.totalorder %s16, 0
    %p121 = por %p119, %p120
    %p122 = scmp.ne.s32.totalorder %s110, %s111
    %p123 = scmp.eq.s32.totalorder %s17, 1
    %p124 = por %p122, %p123
    %p126 = scmp.ne.s32.totalorder %s111, %s125
    %p127 = scmp.eq.s32.totalorder %s17, 0
    %p128 = por %p126, %p127
    %s129 = ssub.s32 %s11, %s18
    %p130 = scmp.eq.s32.totalorder %s129, 0
    %s132 = sadd.s32 %s131, 1
    %s133 = scalar_select %p130, %s131, %s132
    %p136 = pneg %p130
    %p137 = scmp.eq.s32.totalorder %s11, 1
    %p138 = por %p136, %p137
    %p139 = scmp.ne.s32.totalorder %s131, %s134
    %p140 = scmp.eq.s32.totalorder %s11, 0
    %p141 = por %p139, %p140
    %p142 = scmp.ne.s32.totalorder %s131, %s134
    %p143 = scmp.eq.s32.totalorder %s16, 1
    %p144 = por %p142, %p143
    %p145 = scmp.ne.s32.totalorder %s134, %s135
    %p146 = scmp.eq.s32.totalorder %s16, 0
    %p147 = por %p145, %p146
    %p148 = scmp.ne.s32.totalorder %s134, %s135
    %p149 = scmp.eq.s32.totalorder %s17, 1
    %p150 = por %p148, %p149
    %p152 = scmp.ne.s32.totalorder %s135, %s151
    %p153 = scmp.eq.s32.totalorder %s17, 0
    %p154 = por %p152, %p153
    %p155 = scmp.le.s32.totalorder 1, %s11
    %p156 = scmp.lt.s32.totalorder %s11, 3
    %p157 = pnand %p155, %p156
    %p158 = pneg %p157
    // Predicated region
    $region9: #{audio_block.1} parent=5 // pred_check
      _
    $region10: #{audio_block.1} parent=5 // pred_check_branch
      %160 = sbr.rel (%p157) target = $region12
    $region11: #{audio_block.1} parent=5 // pred_region
      %s161 = ssub.s32 %s11, 1
      // Predicated region
      $region13: #{audio_block.1} parent=11 // pred_check
        %p162 = pneg %p58
      $region14: #{audio_block.1} parent=11 // pred_check_branch
        %164 = sbr.rel (%p162) target = $region16
      $region15: #{audio_block.1} parent=11 // pred_region
        _
      $region16: #{audio_block.1} parent=11 // pred_fallthru
        _
      // Predicated region
      $region17: #{audio_block.1} parent=11 // pred_check
        %p165 = pneg %p79
      $region18: #{audio_block.1} parent=11 // pred_check_branch
        %167 = sbr.rel (%p165) target = $region20
      $region19: #{audio_block.1} parent=11 // pred_region
        _
      $region20: #{audio_block.1} parent=11 // pred_fallthru
        _
      // Predicated region
      $region21: #{audio_block.1} parent=11 // pred_check
        %p168 = pneg %p100
      $region22: #{audio_block.1} parent=11 // pred_check_branch
        %170 = sbr.rel (%p168) target = $region24
      $region23: #{audio_block.1} parent=11 // pred_region
        _
      $region24: #{audio_block.1} parent=11 // pred_fallthru
        _
      // Predicated region
      $region25: #{audio_block.1} parent=11 // pred_check
        %p171 = pneg %p121
      $region26: #{audio_block.1} parent=11 // pred_check_branch
        %173 = sbr.rel (%p171) target = $region28
      $region27: #{audio_block.1} parent=11 // pred_region
        _
      $region28: #{audio_block.1} parent=11 // pred_fallthru
        _
    $region12: #{audio_block.1} parent=5 // pred_fallthru
      _
    %p174 = scmp.lt.s32.totalorder %s11, 2
    // Predicated region
    $region29: #{audio_block.1} parent=5 // pred_check
      %p175 = pneg %p174
    $region30: #{audio_block.1} parent=5 // pred_check_branch
      %177 = sbr.rel (%p175) target = $region32
    $region31: #{audio_block.1} parent=5 // pred_region
      // Predicated region
      $region33: #{audio_block.1} parent=31 // pred_check
        %p178 = pneg %p31
      $region34: #{audio_block.1} parent=31 // pred_check_branch
        %180 = sbr.rel (%p178) target = $region36
      $region35: #{audio_block.1} parent=31 // pred_region
        %s181 = smul.u32 2, %s11
        %p182 = scmp.lt.s32.totalorder %s181, 3
        %s183 = scalar_select %p182, %s181, 3
        %s184 = smul.addr %s183, 3
        %s185 = smul.addr %s184, 4
        %s186 = scalar_lea.vmem %s0, %s185
        %s187 = smul.u32 2, %s11
      $region36: #{audio_block.1} parent=31 // pred_fallthru
        _
    $region32: #{audio_block.1} parent=5 // pred_fallthru
      _
    %p188 = scmp.le.s32.totalorder 1, %s11
    %p189 = scmp.lt.s32.totalorder %s11, 3
    %p190 = pnand %p188, %p189
    %p191 = pneg %p190
    // Predicated region
    $region37: #{audio_block.1} parent=5 // pred_check
      _
    $region38: #{audio_block.1} parent=5 // pred_check_branch
      %193 = sbr.rel (%p190) target = $region40
    $region39: #{audio_block.1} parent=5 // pred_region
      %s194 = ssub.s32 %s11, 1
      %s195 = smul.u32 2, %s16
      %p196 = scmp.lt.s32.totalorder %s195, 3
      %s197 = scalar_select %p196, %s195, 3
      %s198 = smul.addr %s197, 3
      %s199 = smul.addr %s198, 4
      %s200 = scalar_lea.vmem %s0, %s199
      %p201 = pneg %p37
      %p202 = pneg %p34
      %p203 = pneg %p58
      %p204 = pneg %p55
      %p205 = pneg %p79
      %p206 = pneg %p76
      %p207 = pneg %p100
      %p208 = pneg %p97
      %p209 = pneg %p121
      %p210 = pneg %p118
      %p211 = pneg %p147
      %p212 = pneg %p144
      %s213 = smul.u32 2, %s16
      %p214 = scmp.lt.s32.totalorder %s213, 3
      %s215 = scalar_select %p214, %s213, 3
      %s216 = smul.addr %s215, 8
      %s217 = scalar_lea.vmem %s5, %s216
      %s218 = smul.u32 2, %s16
      %p219 = scmp.lt.s32.totalorder %s218, 3
      %s220 = scalar_select %p219, %s218, 3
      %s221 = smul.addr %s220, 3
      %s222 = smul.addr %s221, 4
      %s223 = scalar_lea.vmem %s0, %s222
      %s224 = smul.u32 2, %s16
      %s225 = smul.u32 2, %s16
      %p226 = scmp.lt.s32.totalorder %s225, 3
      %s227 = scalar_select %p226, %s225, 3
      %s228 = smul.addr %s227, 8
      %s229 = scalar_lea.vmem %s5, %s228
      %s230 = smul.u32 2, %s16
      %v232 = vld [vmem:[%s4] sm:$0x77]
      %v233 = vld [vmem:[%s223] sm:$0xff]
      %v234 = vld [vmem:[%s223 + $0x8] sm:$0xf]
      %v235 = vld [vmem:[%s223 + $0xc] sm:$0xff]
      %v236 = vld [vmem:[%s223 + $0x14] sm:$0xf]
      %v237 = vld [vmem:[%s1] sm:$0xff]
      %v238 = vld [vmem:[%s1 + $0x8] sm:$0xff]
      %v239 = vld [vmem:[%s1 + $0x10] sm:$0xff]
      %v240 = vld [vmem:[%s1 + $0x18] sm:$0xff]
      %v241 = vld [vmem:[%s1 + $0x20] sm:$0xff]
      %v242 = vld [vmem:[%s1 + $0x28] sm:$0xff]
      %v243 = vld [vmem:[%s1 + $0x30] sm:$0xff]
      %v244 = vld [vmem:[%s1 + $0x38] sm:$0xff]
      %v245 = vld [vmem:[%s1 + $0x40] sm:$0xff]
      %v246 = vld [vmem:[%s1 + $0x48] sm:$0xff]
      %v247 = vld [vmem:[%s1 + $0x50] sm:$0xff]
      %v248 = vld [vmem:[%s1 + $0x58] sm:$0xff]
      %v249 = vld [vmem:[%s1 + $0x60] sm:$0xff]
      %v250 = vld [vmem:[%s1 + $0x68] sm:$0xff]
      %v251 = vld [vmem:[%s1 + $0x70] sm:$0xff]
      %v252 = vld [vmem:[%s1 + $0x78] sm:$0xff]
      %v253 = vld [vmem:[%s1 + $0x80] sm:$0xff]
      %v254 = vld [vmem:[%s1 + $0x88] sm:$0xff]
      %v255 = vld [vmem:[%s1 + $0x90] sm:$0xff]
      %v256 = vld [vmem:[%s1 + $0x98] sm:$0xff]
      %v257 = vld [vmem:[%s1 + $0xa0] sm:$0xff]
      %v258 = vld [vmem:[%s1 + $0xa8] sm:$0xff]
      %v259 = vld [vmem:[%s1 + $0xb0] sm:$0xff]
      %v260 = vld [vmem:[%s1 + $0xb8] sm:$0xff]
      %v261 = vld [vmem:[%s1 + $0xc0] sm:$0xff]
      %v262 = vld [vmem:[%s1 + $0xc8] sm:$0xff]
      %v263 = vld [vmem:[%s1 + $0xd0] sm:$0xff]
      %v264 = vld [vmem:[%s1 + $0xd8] sm:$0xff]
      %v265 = vld [vmem:[%s1 + $0xe0] sm:$0xff]
      %v266 = vld [vmem:[%s1 + $0xe8] sm:$0xff]
      %v267 = vld [vmem:[%s1 + $0xf0] sm:$0xff]
      %v268 = vld [vmem:[%s1 + $0xf8] sm:$0xff]
      %v269 = vld [vmem:[%s1 + $0x100] sm:$0xff]
      %v270 = vld [vmem:[%s1 + $0x108] sm:$0xff]
      %v271 = vld [vmem:[%s1 + $0x110] sm:$0xff]
      %v272 = vld [vmem:[%s1 + $0x118] sm:$0xff]
      %v273 = vld [vmem:[%s1 + $0x120] sm:$0xff]
      %v274 = vld [vmem:[%s1 + $0x128] sm:$0xff]
      %v275 = vld [vmem:[%s1 + $0x130] sm:$0xff]
      %v276 = vld [vmem:[%s1 + $0x138] sm:$0xff]
      %v277 = vld [vmem:[%s1 + $0x140] sm:$0xff]
      %v278 = vld [vmem:[%s1 + $0x148] sm:$0xff]
      %v279 = vld [vmem:[%s1 + $0x150] sm:$0xff]
      %v280 = vld [vmem:[%s1 + $0x158] sm:$0xff]
      %v281 = vld [vmem:[%s1 + $0x160] sm:$0xff]
      %v282 = vld [vmem:[%s1 + $0x168] sm:$0xff]
      %v283 = vld [vmem:[%s1 + $0x170] sm:$0xff]
      %v284 = vld [vmem:[%s1 + $0x178] sm:$0xff]
      %v286 = vlaneseq
      %v287 = vshrl.u32 %v286, 7
      %v288 = vsub.s32 0, %v287
      %v289 = vrot.slane %v232, %v288
      %v290 = vlaneseq
      %v291 = vshrl.u32 %v290, 7
      %v292 = vsub.s32 4, %v291
      %v293 = vrot.slane %v232, %v292
      %v296 = vlaneseq
      %v297 = vshrl.u32 %v296, 7
      %v298 = vsub.s32 0, %v297
      %v299 = vrot.slane %v289, %v298
      %v300 = vlaneseq
      %v301 = vshrl.u32 %v300, 7
      %v302 = vsub.s32 0, %v301
      %v303 = vrot.slane %v293, %v302
      %v308 = vunpack.c.l.b16 %v233
      %v309 = vunpack.c.h.b16 %v233
      %v310 = vunpack.c.l.b16 %v234
      %v311 = vunpack.c.l.b16 %v235
      %v312 = vunpack.c.h.b16 %v235
      %v313 = vunpack.c.l.b16 %v236
      %v314 = vpack.c.b16 %v311, %v308
      %v315 = vpack.c.b16 %v312, %v309
      %v316 = vpack.c.b16 %v313, %v310
      %v368 = vunpack.c.l.b16 %v237
      %v369 = vunpack.c.h.b16 %v237
      %v370 = vunpack.c.l.b16 %v238
      %v371 = vunpack.c.h.b16 %v238
      %v372 = vunpack.c.l.b16 %v239
      %v373 = vunpack.c.h.b16 %v239
      %v374 = vunpack.c.l.b16 %v240
      %v375 = vunpack.c.h.b16 %v240
      %v376 = vunpack.c.l.b16 %v241
      %v377 = vunpack.c.h.b16 %v241
      %v378 = vunpack.c.l.b16 %v242
      %v379 = vunpack.c.h.b16 %v242
      %v380 = vunpack.c.l.b16 %v243
      %v381 = vunpack.c.h.b16 %v243
      %v382 = vunpack.c.l.b16 %v244
      %v383 = vunpack.c.h.b16 %v244
      %v384 = vunpack.c.l.b16 %v245
      %v385 = vunpack.c.h.b16 %v245
      %v386 = vunpack.c.l.b16 %v246
      %v387 = vunpack.c.h.b16 %v246
      %v388 = vunpack.c.l.b16 %v247
      %v389 = vunpack.c.h.b16 %v247
      %v390 = vunpack.c.l.b16 %v248
      %v391 = vunpack.c.h.b16 %v248
      %v392 = vunpack.c.l.b16 %v249
      %v393 = vunpack.c.h.b16 %v249
      %v394 = vunpack.c.l.b16 %v250
      %v395 = vunpack.c.h.b16 %v250
      %v396 = vunpack.c.l.b16 %v251
      %v397 = vunpack.c.h.b16 %v251
      %v398 = vunpack.c.l.b16 %v252
      %v399 = vunpack.c.h.b16 %v252
      %v400 = vunpack.c.l.b16 %v253
      %v401 = vunpack.c.h.b16 %v253
      %v402 = vunpack.c.l.b16 %v254
      %v403 = vunpack.c.h.b16 %v254
      %v404 = vunpack.c.l.b16 %v255
      %v405 = vunpack.c.h.b16 %v255
      %v406 = vunpack.c.l.b16 %v256
      %v407 = vunpack.c.h.b16 %v256
      %v408 = vunpack.c.l.b16 %v257
      %v409 = vunpack.c.h.b16 %v257
      %v410 = vunpack.c.l.b16 %v258
      %v411 = vunpack.c.h.b16 %v258
      %v412 = vunpack.c.l.b16 %v259
      %v413 = vunpack.c.h.b16 %v259
      %v414 = vunpack.c.l.b16 %v260
      %v415 = vunpack.c.h.b16 %v260
      %v416 = vunpack.c.l.b16 %v261
      %v417 = vunpack.c.h.b16 %v261
      %v418 = vunpack.c.l.b16 %v262
      %v419 = vunpack.c.h.b16 %v262
      %v420 = vunpack.c.l.b16 %v263
      %v421 = vunpack.c.h.b16 %v263
      %v422 = vunpack.c.l.b16 %v264
      %v423 = vunpack.c.h.b16 %v264
      %v424 = vunpack.c.l.b16 %v265
      %v425 = vunpack.c.h.b16 %v265
      %v426 = vunpack.c.l.b16 %v266
      %v427 = vunpack.c.h.b16 %v266
      %v428 = vunpack.c.l.b16 %v267
      %v429 = vunpack.c.h.b16 %v267
      %v430 = vunpack.c.l.b16 %v268
      %v431 = vunpack.c.h.b16 %v268
      %v432 = vunpack.c.l.b16 %v269
      %v433 = vunpack.c.h.b16 %v269
      %v434 = vunpack.c.l.b16 %v270
      %v435 = vunpack.c.h.b16 %v270
      %v436 = vunpack.c.l.b16 %v271
      %v437 = vunpack.c.h.b16 %v271
      %v438 = vunpack.c.l.b16 %v272
      %v439 = vunpack.c.h.b16 %v272
      %v440 = vunpack.c.l.b16 %v273
      %v441 = vunpack.c.h.b16 %v273
      %v442 = vunpack.c.l.b16 %v274
      %v443 = vunpack.c.h.b16 %v274
      %v444 = vunpack.c.l.b16 %v275
      %v445 = vunpack.c.h.b16 %v275
      %v446 = vunpack.c.l.b16 %v276
      %v447 = vunpack.c.h.b16 %v276
      %v448 = vunpack.c.l.b16 %v277
      %v449 = vunpack.c.h.b16 %v277
      %v450 = vunpack.c.l.b16 %v278
      %v451 = vunpack.c.h.b16 %v278
      %v452 = vunpack.c.l.b16 %v279
      %v453 = vunpack.c.h.b16 %v279
      %v454 = vunpack.c.l.b16 %v280
      %v455 = vunpack.c.h.b16 %v280
      %v456 = vunpack.c.l.b16 %v281
      %v457 = vunpack.c.h.b16 %v281
      %v458 = vunpack.c.l.b16 %v282
      %v459 = vunpack.c.h.b16 %v282
      %v460 = vunpack.c.l.b16 %v283
      %v461 = vunpack.c.h.b16 %v283
      %v462 = vunpack.c.l.b16 %v284
      %v463 = vunpack.c.h.b16 %v284
      %v464 = vpack.c.b16 %v370, %v368
      %v465 = vpack.c.b16 %v371, %v369
      %v466 = vpack.c.b16 %v374, %v372
      %v467 = vpack.c.b16 %v375, %v373
      %v468 = vpack.c.b16 %v378, %v376
      %v469 = vpack.c.b16 %v379, %v377
      %v470 = vpack.c.b16 %v382, %v380
      %v471 = vpack.c.b16 %v383, %v381
      %v472 = vpack.c.b16 %v386, %v384
      %v473 = vpack.c.b16 %v387, %v385
      %v474 = vpack.c.b16 %v390, %v388
      %v475 = vpack.c.b16 %v391, %v389
      %v476 = vpack.c.b16 %v394, %v392
      %v477 = vpack.c.b16 %v395, %v393
      %v478 = vpack.c.b16 %v398, %v396
      %v479 = vpack.c.b16 %v399, %v397
      %v480 = vpack.c.b16 %v402, %v400
      %v481 = vpack.c.b16 %v403, %v401
      %v482 = vpack.c.b16 %v406, %v404
      %v483 = vpack.c.b16 %v407, %v405
      %v484 = vpack.c.b16 %v410, %v408
      %v485 = vpack.c.b16 %v411, %v409
      %v486 = vpack.c.b16 %v414, %v412
      %v487 = vpack.c.b16 %v415, %v413
      %v488 = vpack.c.b16 %v418, %v416
      %v489 = vpack.c.b16 %v419, %v417
      %v490 = vpack.c.b16 %v422, %v420
      %v491 = vpack.c.b16 %v423, %v421
      %v492 = vpack.c.b16 %v426, %v424
      %v493 = vpack.c.b16 %v427, %v425
      %v494 = vpack.c.b16 %v430, %v428
      %v495 = vpack.c.b16 %v431, %v429
      %v496 = vpack.c.b16 %v434, %v432
      %v497 = vpack.c.b16 %v435, %v433
      %v498 = vpack.c.b16 %v438, %v436
      %v499 = vpack.c.b16 %v439, %v437
      %v500 = vpack.c.b16 %v442, %v440
      %v501 = vpack.c.b16 %v443, %v441
      %v502 = vpack.c.b16 %v446, %v444
      %v503 = vpack.c.b16 %v447, %v445
      %v504 = vpack.c.b16 %v450, %v448
      %v505 = vpack.c.b16 %v451, %v449
      %v506 = vpack.c.b16 %v454, %v452
      %v507 = vpack.c.b16 %v455, %v453
      %v508 = vpack.c.b16 %v458, %v456
      %v509 = vpack.c.b16 %v459, %v457
      %v510 = vpack.c.b16 %v462, %v460
      %v511 = vpack.c.b16 %v463, %v461
      %560 = vmatprep.subr.bf16.mxu0 %v465
      %561 = vmatpush1.bf16.msra.mxu0 %v464
      %562 = vmatprep.subr.bf16.mxu0 %v467
      %563 = vmatpush1.bf16.msra.mxu0 %v466
      %564 = vmatprep.subr.bf16.mxu0 %v469
      %565 = vmatpush1.bf16.msra.mxu0 %v468
      %566 = vmatprep.subr.bf16.mxu0 %v471
      %567 = vmatpush1.bf16.msra.mxu0 %v470
      %568 = vmatprep.subr.bf16.mxu0 %v473
      %569 = vmatpush1.bf16.msra.mxu0 %v472
      %570 = vmatprep.subr.bf16.mxu0 %v475
      %571 = vmatpush1.bf16.msra.mxu0 %v474
      %572 = vmatprep.subr.bf16.mxu0 %v477
      %573 = vmatpush1.bf16.msra.mxu0 %v476
      %574 = vmatprep.subr.bf16.mxu0 %v479
      %575 = vmatpush1.bf16.msra.mxu0 %v478
      %576 = vmatprep.subr.bf16.mxu0 %v481
      %577 = vmatpush1.bf16.msra.mxu0 %v480
      %578 = vmatprep.subr.bf16.mxu0 %v483
      %579 = vmatpush1.bf16.msra.mxu0 %v482
      %580 = vmatprep.subr.bf16.mxu0 %v485
      %581 = vmatpush1.bf16.msra.mxu0 %v484
      %582 = vmatprep.subr.bf16.mxu0 %v487
      %583 = vmatpush1.bf16.msra.mxu0 %v486
      %584 = vmatprep.subr.bf16.mxu0 %v489
      %585 = vmatpush1.bf16.msra.mxu0 %v488
      %586 = vmatprep.subr.bf16.mxu0 %v491
      %587 = vmatpush1.bf16.msra.mxu0 %v490
      %588 = vmatprep.subr.bf16.mxu0 %v493
      %589 = vmatpush1.bf16.msra.mxu0 %v492
      %590 = vmatprep.subr.bf16.mxu0 %v495
      %591 = vmatpush1.bf16.msra.mxu0 %v494
      %592 = vmatprep.mubr.bf16.mxu0 %v315
      %593 = vmatmul.mubr.bf16.gmra.mrb[0].mxu0 %v314
      %v594 = vpop.f32.mrb[0].mxu0
      %v595 = vadd.f32 %v299, %v594
      %v596 = vpop.f32.mrb[0].mxu0
      %v597 = vadd.f32 %v303, %v596
      %v598 = vpop.f32.mrb[0].mxu0
      %v599 = vadd.f32 %v299, %v598
      %v600 = vpop.f32.mrb[0].mxu0
      %v601 = vadd.f32 %v303, %v600
      %602 = vdwg.mxu0
      %603 = vmatprep.subr.bf16.mxu0 %v497
      %604 = vmatpush1.bf16.msra.mxu0 %v496
      %605 = vmatprep.subr.bf16.mxu0 %v499
      %606 = vmatpush1.bf16.msra.mxu0 %v498
      %607 = vmatprep.subr.bf16.mxu0 %v501
      %608 = vmatpush1.bf16.msra.mxu0 %v500
      %609 = vmatprep.subr.bf16.mxu0 %v503
      %610 = vmatpush1.bf16.msra.mxu0 %v502
      %611 = vmatprep.subr.bf16.mxu0 %v505
      %612 = vmatpush1.bf16.msra.mxu0 %v504
      %613 = vmatprep.subr.bf16.mxu0 %v507
      %614 = vmatpush1.bf16.msra.mxu0 %v506
      %615 = vmatprep.subr.bf16.mxu0 %v509
      %616 = vmatpush1.bf16.msra.mxu0 %v508
      %617 = vmatprep.subr.bf16.mxu0 %v511
      %618 = vmatpush1.bf16.msra.mxu0 %v510
      %619 = vmatprep.subr.bf16.mxu0 0
      %620 = vmatpush1.bf16.msra.mxu0 0
      %621 = vmatprep.subr.bf16.mxu0 0
      %622 = vmatpush1.bf16.msra.mxu0 0
      %623 = vmatprep.subr.bf16.mxu0 0
      %624 = vmatpush1.bf16.msra.mxu0 0
      %625 = vmatprep.subr.bf16.mxu0 0
      %626 = vmatpush1.bf16.msra.mxu0 0
      %627 = vmatprep.subr.bf16.mxu0 0
      %628 = vmatpush1.bf16.msra.mxu0 0
      %629 = vmatprep.subr.bf16.mxu0 0
      %630 = vmatpush1.bf16.msra.mxu0 0
      %631 = vmatprep.subr.bf16.mxu0 0
      %632 = vmatpush1.bf16.msra.mxu0 0
      %633 = vmatprep.subr.bf16.mxu0 0
      %634 = vmatpush1.bf16.msra.mxu0 0
      %635 = vmatprep.mubr.bf16.mxu0 0
      %636 = vmatmul.mubr.bf16.gmra.mrb[0].mxu0 %v316
      %v637 = vpop.f32.mrb[0].mxu0
      %v638 = vadd.f32 %v595, %v637
      %v639 = vpop.f32.mrb[0].mxu0
      %v640 = vadd.f32 %v597, %v639
      %v641 = vpop.f32.mrb[0].mxu0
      %v642 = vadd.f32 %v599, %v641
      %v643 = vpop.f32.mrb[0].mxu0
      %v644 = vadd.f32 %v601, %v643
      %645 = vdwg.mxu0
      %v646 = vmax.f32 %v638, 0.0
      %v647 = vmax.f32 %v640, 0.0
      %v648 = vmax.f32 %v642, 0.0
      %v649 = vmax.f32 %v644, 0.0
      %v650 = vpack.c.bf16 %v648, %v646
      %v651 = vpack.c.bf16 %v649, %v647
      %v652 = vld [vmem:[%s2] sm:$0xff]
      %v653 = vld [vmem:[%s2 + $0x8] sm:$0xff]
      %v654 = vld [vmem:[%s2 + $0x10] sm:$0xff]
      %v655 = vld [vmem:[%s2 + $0x18] sm:$0xff]
      %v656 = vld [vmem:[%s2 + $0x20] sm:$0xff]
      %v657 = vld [vmem:[%s2 + $0x28] sm:$0xff]
      %v658 = vld [vmem:[%s2 + $0x30] sm:$0xff]
      %v659 = vld [vmem:[%s2 + $0x38] sm:$0xff]
      %v660 = vld [vmem:[%s2 + $0x40] sm:$0xff]
      %v661 = vld [vmem:[%s2 + $0x48] sm:$0xff]
      %v662 = vld [vmem:[%s2 + $0x50] sm:$0xff]
      %v663 = vld [vmem:[%s2 + $0x58] sm:$0xff]
      %v664 = vld [vmem:[%s2 + $0x60] sm:$0xff]
      %v665 = vld [vmem:[%s2 + $0x68] sm:$0xff]
      %v666 = vld [vmem:[%s2 + $0x70] sm:$0xff]
      %v667 = vld [vmem:[%s2 + $0x78] sm:$0xff]
      %v668 = vld [vmem:[%s2 + $0x80] sm:$0xff]
      %v669 = vld [vmem:[%s2 + $0x88] sm:$0xff]
      %v670 = vld [vmem:[%s2 + $0x90] sm:$0xff]
      %v671 = vld [vmem:[%s2 + $0x98] sm:$0xff]
      %v672 = vld [vmem:[%s2 + $0xa0] sm:$0xff]
      %v673 = vld [vmem:[%s2 + $0xa8] sm:$0xff]
      %v674 = vld [vmem:[%s2 + $0xb0] sm:$0xff]
      %v675 = vld [vmem:[%s2 + $0xb8] sm:$0xff]
      %v676 = vld [vmem:[%s2 + $0xc0] sm:$0xff]
      %v677 = vld [vmem:[%s2 + $0xc8] sm:$0xff]
      %v678 = vld [vmem:[%s2 + $0xd0] sm:$0xff]
      %v679 = vld [vmem:[%s2 + $0xd8] sm:$0xff]
      %v680 = vld [vmem:[%s2 + $0xe0] sm:$0xff]
      %v681 = vld [vmem:[%s2 + $0xe8] sm:$0xff]
      %v682 = vld [vmem:[%s2 + $0xf0] sm:$0xff]
      %v683 = vld [vmem:[%s2 + $0xf8] sm:$0xff]
      %v684 = vlaneseq
      %v685 = vshrl.u32 %v684, 7
      %v686 = vsub.s32 1, %v685
      %v687 = vrot.slane %v232, %v686
      %v688 = vlaneseq
      %v689 = vshrl.u32 %v688, 7
      %v690 = vsub.s32 5, %v689
      %v691 = vrot.slane %v232, %v690
      %v694 = vlaneseq
      %v695 = vshrl.u32 %v694, 7
      %v696 = vsub.s32 1, %v695
      %v697 = vrot.slane %v687, %v696
      %v698 = vlaneseq
      %v699 = vshrl.u32 %v698, 7
      %v700 = vsub.s32 1, %v699
      %v701 = vrot.slane %v691, %v700
      %v734 = vunpack.c.l.b16 %v652
      %v735 = vunpack.c.h.b16 %v652
      %v736 = vunpack.c.l.b16 %v653
      %v737 = vunpack.c.h.b16 %v653
      %v738 = vunpack.c.l.b16 %v654
      %v739 = vunpack.c.h.b16 %v654
      %v740 = vunpack.c.l.b16 %v655
      %v741 = vunpack.c.h.b16 %v655
      %v742 = vunpack.c.l.b16 %v656
      %v743 = vunpack.c.h.b16 %v656
      %v744 = vunpack.c.l.b16 %v657
      %v745 = vunpack.c.h.b16 %v657
      %v746 = vunpack.c.l.b16 %v658
      %v747 = vunpack.c.h.b16 %v658
      %v748 = vunpack.c.l.b16 %v659
      %v749 = vunpack.c.h.b16 %v659
      %v750 = vunpack.c.l.b16 %v660
      %v751 = vunpack.c.h.b16 %v660
      %v752 = vunpack.c.l.b16 %v661
      %v753 = vunpack.c.h.b16 %v661
      %v754 = vunpack.c.l.b16 %v662
      %v755 = vunpack.c.h.b16 %v662
      %v756 = vunpack.c.l.b16 %v663
      %v757 = vunpack.c.h.b16 %v663
      %v758 = vunpack.c.l.b16 %v664
      %v759 = vunpack.c.h.b16 %v664
      %v760 = vunpack.c.l.b16 %v665
      %v761 = vunpack.c.h.b16 %v665
      %v762 = vunpack.c.l.b16 %v666
      %v763 = vunpack.c.h.b16 %v666
      %v764 = vunpack.c.l.b16 %v667
      %v765 = vunpack.c.h.b16 %v667
      %v766 = vunpack.c.l.b16 %v668
      %v767 = vunpack.c.h.b16 %v668
      %v768 = vunpack.c.l.b16 %v669
      %v769 = vunpack.c.h.b16 %v669
      %v770 = vunpack.c.l.b16 %v670
      %v771 = vunpack.c.h.b16 %v670
      %v772 = vunpack.c.l.b16 %v671
      %v773 = vunpack.c.h.b16 %v671
      %v774 = vunpack.c.l.b16 %v672
      %v775 = vunpack.c.h.b16 %v672
      %v776 = vunpack.c.l.b16 %v673
      %v777 = vunpack.c.h.b16 %v673
      %v778 = vunpack.c.l.b16 %v674
      %v779 = vunpack.c.h.b16 %v674
      %v780 = vunpack.c.l.b16 %v675
      %v781 = vunpack.c.h.b16 %v675
      %v782 = vunpack.c.l.b16 %v676
      %v783 = vunpack.c.h.b16 %v676
      %v784 = vunpack.c.l.b16 %v677
      %v785 = vunpack.c.h.b16 %v677
      %v786 = vunpack.c.l.b16 %v678
      %v787 = vunpack.c.h.b16 %v678
      %v788 = vunpack.c.l.b16 %v679
      %v789 = vunpack.c.h.b16 %v679
      %v790 = vunpack.c.l.b16 %v680
      %v791 = vunpack.c.h.b16 %v680
      %v792 = vunpack.c.l.b16 %v681
      %v793 = vunpack.c.h.b16 %v681
      %v794 = vunpack.c.l.b16 %v682
      %v795 = vunpack.c.h.b16 %v682
      %v796 = vunpack.c.l.b16 %v683
      %v797 = vunpack.c.h.b16 %v683
      %v798 = vpack.c.b16 %v736, %v734
      %v799 = vpack.c.b16 %v737, %v735
      %v800 = vpack.c.b16 %v740, %v738
      %v801 = vpack.c.b16 %v741, %v739
      %v802 = vpack.c.b16 %v744, %v742
      %v803 = vpack.c.b16 %v745, %v743
      %v804 = vpack.c.b16 %v748, %v746
      %v805 = vpack.c.b16 %v749, %v747
      %v806 = vpack.c.b16 %v752, %v750
      %v807 = vpack.c.b16 %v753, %v751
      %v808 = vpack.c.b16 %v756, %v754
      %v809 = vpack.c.b16 %v757, %v755
      %v810 = vpack.c.b16 %v760, %v758
      %v811 = vpack.c.b16 %v761, %v759
      %v812 = vpack.c.b16 %v764, %v762
      %v813 = vpack.c.b16 %v765, %v763
      %v814 = vpack.c.b16 %v768, %v766
      %v815 = vpack.c.b16 %v769, %v767
      %v816 = vpack.c.b16 %v772, %v770
      %v817 = vpack.c.b16 %v773, %v771
      %v818 = vpack.c.b16 %v776, %v774
      %v819 = vpack.c.b16 %v777, %v775
      %v820 = vpack.c.b16 %v780, %v778
      %v821 = vpack.c.b16 %v781, %v779
      %v822 = vpack.c.b16 %v784, %v782
      %v823 = vpack.c.b16 %v785, %v783
      %v824 = vpack.c.b16 %v788, %v786
      %v825 = vpack.c.b16 %v789, %v787
      %v826 = vpack.c.b16 %v792, %v790
      %v827 = vpack.c.b16 %v793, %v791
      %v828 = vpack.c.b16 %v796, %v794
      %v829 = vpack.c.b16 %v797, %v795
      %862 = vmatprep.subr.bf16.mxu0 %v799
      %863 = vmatpush1.bf16.msra.mxu0 %v798
      %864 = vmatprep.subr.bf16.mxu0 %v801
      %865 = vmatpush1.bf16.msra.mxu0 %v800
      %866 = vmatprep.subr.bf16.mxu0 %v803
      %867 = vmatpush1.bf16.msra.mxu0 %v802
      %868 = vmatprep.subr.bf16.mxu0 %v805
      %869 = vmatpush1.bf16.msra.mxu0 %v804
      %870 = vmatprep.subr.bf16.mxu0 %v807
      %871 = vmatpush1.bf16.msra.mxu0 %v806
      %872 = vmatprep.subr.bf16.mxu0 %v809
      %873 = vmatpush1.bf16.msra.mxu0 %v808
      %874 = vmatprep.subr.bf16.mxu0 %v811
      %875 = vmatpush1.bf16.msra.mxu0 %v810
      %876 = vmatprep.subr.bf16.mxu0 %v813
      %877 = vmatpush1.bf16.msra.mxu0 %v812
      %878 = vmatprep.subr.bf16.mxu0 %v815
      %879 = vmatpush1.bf16.msra.mxu0 %v814
      %880 = vmatprep.subr.bf16.mxu0 %v817
      %881 = vmatpush1.bf16.msra.mxu0 %v816
      %882 = vmatprep.subr.bf16.mxu0 %v819
      %883 = vmatpush1.bf16.msra.mxu0 %v818
      %884 = vmatprep.subr.bf16.mxu0 %v821
      %885 = vmatpush1.bf16.msra.mxu0 %v820
      %886 = vmatprep.subr.bf16.mxu0 %v823
      %887 = vmatpush1.bf16.msra.mxu0 %v822
      %888 = vmatprep.subr.bf16.mxu0 %v825
      %889 = vmatpush1.bf16.msra.mxu0 %v824
      %890 = vmatprep.subr.bf16.mxu0 %v827
      %891 = vmatpush1.bf16.msra.mxu0 %v826
      %892 = vmatprep.subr.bf16.mxu0 %v829
      %893 = vmatpush1.bf16.msra.mxu0 %v828
      %894 = vmatprep.mubr.bf16.mxu0 %v651
      %895 = vmatmul.mubr.bf16.gmra.mrb[0].mxu0 %v650
      %v896 = vpop.f32.mrb[0].mxu0
      %v897 = vadd.f32 %v697, %v896
      %v898 = vpop.f32.mrb[0].mxu0
      %v899 = vadd.f32 %v701, %v898
      %v900 = vpop.f32.mrb[0].mxu0
      %v901 = vadd.f32 %v697, %v900
      %v902 = vpop.f32.mrb[0].mxu0
      %v903 = vadd.f32 %v701, %v902
      %904 = vdwg.mxu0
      %v905 = vmax.f32 %v897, 0.0
      %v906 = vmax.f32 %v899, 0.0
      %v907 = vmax.f32 %v901, 0.0
      %v908 = vmax.f32 %v903, 0.0
      %v909 = vpack.c.bf16 %v907, %v905
      %v910 = vpack.c.bf16 %v908, %v906
      %v911 = vld [vmem:[%s3] sm:$0xf]
      %v912 = vld [vmem:[%s3 + $0x4] sm:$0xf]
      %v913 = vld [vmem:[%s3 + $0x8] sm:$0xf]
      %v914 = vld [vmem:[%s3 + $0xc] sm:$0xf]
      %v915 = vld [vmem:[%s3 + $0x10] sm:$0xf]
      %v916 = vld [vmem:[%s3 + $0x14] sm:$0xf]
      %v917 = vld [vmem:[%s3 + $0x18] sm:$0xf]
      %v918 = vld [vmem:[%s3 + $0x1c] sm:$0xf]
      %v919 = vld [vmem:[%s3 + $0x20] sm:$0xf]
      %v920 = vld [vmem:[%s3 + $0x24] sm:$0xf]
      %v921 = vld [vmem:[%s3 + $0x28] sm:$0xf]
      %v922 = vld [vmem:[%s3 + $0x2c] sm:$0xf]
      %v923 = vld [vmem:[%s3 + $0x30] sm:$0xf]
      %v924 = vld [vmem:[%s3 + $0x34] sm:$0xf]
      %v925 = vld [vmem:[%s3 + $0x38] sm:$0xf]
      %v926 = vld [vmem:[%s3 + $0x3c] sm:$0xf]
      %v927 = vld [vmem:[%s3 + $0x40] sm:$0xf]
      %v928 = vld [vmem:[%s3 + $0x44] sm:$0xf]
      %v929 = vld [vmem:[%s3 + $0x48] sm:$0xf]
      %v930 = vld [vmem:[%s3 + $0x4c] sm:$0xf]
      %v931 = vld [vmem:[%s3 + $0x50] sm:$0xf]
      %v932 = vld [vmem:[%s3 + $0x54] sm:$0xf]
      %v933 = vld [vmem:[%s3 + $0x58] sm:$0xf]
      %v934 = vld [vmem:[%s3 + $0x5c] sm:$0xf]
      %v935 = vld [vmem:[%s3 + $0x60] sm:$0xf]
      %v936 = vld [vmem:[%s3 + $0x64] sm:$0xf]
      %v937 = vld [vmem:[%s3 + $0x68] sm:$0xf]
      %v938 = vld [vmem:[%s3 + $0x6c] sm:$0xf]
      %v939 = vld [vmem:[%s3 + $0x70] sm:$0xf]
      %v940 = vld [vmem:[%s3 + $0x74] sm:$0xf]
      %v941 = vld [vmem:[%s3 + $0x78] sm:$0xf]
      %v942 = vld [vmem:[%s3 + $0x7c] sm:$0xf]
      %v943 = vlaneseq
      %v944 = vshrl.u32 %v943, 7
      %v945 = vsub.s32 2, %v944
      %v946 = vrot.slane %v232, %v945
      %v979 = vunpack.c.l.b16 %v911
      %v980 = vunpack.c.l.b16 %v912
      %v981 = vunpack.c.l.b16 %v913
      %v982 = vunpack.c.l.b16 %v914
      %v983 = vunpack.c.l.b16 %v915
      %v984 = vunpack.c.l.b16 %v916
      %v985 = vunpack.c.l.b16 %v917
      %v986 = vunpack.c.l.b16 %v918
      %v987 = vunpack.c.l.b16 %v919
      %v988 = vunpack.c.l.b16 %v920
      %v989 = vunpack.c.l.b16 %v921
      %v990 = vunpack.c.l.b16 %v922
      %v991 = vunpack.c.l.b16 %v923
      %v992 = vunpack.c.l.b16 %v924
      %v993 = vunpack.c.l.b16 %v925
      %v994 = vunpack.c.l.b16 %v926
      %v995 = vunpack.c.l.b16 %v927
      %v996 = vunpack.c.l.b16 %v928
      %v997 = vunpack.c.l.b16 %v929
      %v998 = vunpack.c.l.b16 %v930
      %v999 = vunpack.c.l.b16 %v931
      %v1000 = vunpack.c.l.b16 %v932
      %v1001 = vunpack.c.l.b16 %v933
      %v1002 = vunpack.c.l.b16 %v934
      %v1003 = vunpack.c.l.b16 %v935
      %v1004 = vunpack.c.l.b16 %v936
      %v1005 = vunpack.c.l.b16 %v937
      %v1006 = vunpack.c.l.b16 %v938
      %v1007 = vunpack.c.l.b16 %v939
      %v1008 = vunpack.c.l.b16 %v940
      %v1009 = vunpack.c.l.b16 %v941
      %v1010 = vunpack.c.l.b16 %v942
      %v1011 = vpack.c.b16 %v980, %v979
      %v1012 = vpack.c.b16 %v982, %v981
      %v1013 = vpack.c.b16 %v984, %v983
      %v1014 = vpack.c.b16 %v986, %v985
      %v1015 = vpack.c.b16 %v988, %v987
      %v1016 = vpack.c.b16 %v990, %v989
      %v1017 = vpack.c.b16 %v992, %v991
      %v1018 = vpack.c.b16 %v994, %v993
      %v1019 = vpack.c.b16 %v996, %v995
      %v1020 = vpack.c.b16 %v998, %v997
      %v1021 = vpack.c.b16 %v1000, %v999
      %v1022 = vpack.c.b16 %v1002, %v1001
      %v1023 = vpack.c.b16 %v1004, %v1003
      %v1024 = vpack.c.b16 %v1006, %v1005
      %v1025 = vpack.c.b16 %v1008, %v1007
      %v1026 = vpack.c.b16 %v1010, %v1009
      %1043 = vmatprep.subr.bf16.mxu0 0
      %1044 = vmatpush1.bf16.msra.mxu0 %v1011
      %1045 = vmatprep.subr.bf16.mxu0 0
      %1046 = vmatpush1.bf16.msra.mxu0 %v1012
      %1047 = vmatprep.subr.bf16.mxu0 0
      %1048 = vmatpush1.bf16.msra.mxu0 %v1013
      %1049 = vmatprep.subr.bf16.mxu0 0
      %1050 = vmatpush1.bf16.msra.mxu0 %v1014
      %1051 = vmatprep.subr.bf16.mxu0 0
      %1052 = vmatpush1.bf16.msra.mxu0 %v1015
      %1053 = vmatprep.subr.bf16.mxu0 0
      %1054 = vmatpush1.bf16.msra.mxu0 %v1016
      %1055 = vmatprep.subr.bf16.mxu0 0
      %1056 = vmatpush1.bf16.msra.mxu0 %v1017
      %1057 = vmatprep.subr.bf16.mxu0 0
      %1058 = vmatpush1.bf16.msra.mxu0 %v1018
      %1059 = vmatprep.subr.bf16.mxu0 0
      %1060 = vmatpush1.bf16.msra.mxu0 %v1019
      %1061 = vmatprep.subr.bf16.mxu0 0
      %1062 = vmatpush1.bf16.msra.mxu0 %v1020
      %1063 = vmatprep.subr.bf16.mxu0 0
      %1064 = vmatpush1.bf16.msra.mxu0 %v1021
      %1065 = vmatprep.subr.bf16.mxu0 0
      %1066 = vmatpush1.bf16.msra.mxu0 %v1022
      %1067 = vmatprep.subr.bf16.mxu0 0
      %1068 = vmatpush1.bf16.msra.mxu0 %v1023
      %1069 = vmatprep.subr.bf16.mxu0 0
      %1070 = vmatpush1.bf16.msra.mxu0 %v1024
      %1071 = vmatprep.subr.bf16.mxu0 0
      %1072 = vmatpush1.bf16.msra.mxu0 %v1025
      %1073 = vmatprep.subr.bf16.mxu0 0
      %1074 = vmatpush1.bf16.msra.mxu0 %v1026
      %1075 = vmatprep.mubr.bf16.mxu0 %v910
      %1076 = vmatmul.mubr.bf16.gmra.mrb[0].mxu0 %v909
      %v1077 = vpop.f32.mrb[0].mxu0
      %v1078 = vadd.f32 %v946, %v1077
      %v1079 = vpop.f32.mrb[0].mxu0
      %v1080 = vpop.f32.mrb[0].mxu0
      %v1081 = vadd.f32 %v946, %v1080
      %v1082 = vpop.f32.mrb[0].mxu0
      %1083 = vdwg.mxu0
      %v1084 = vmax.f32 %v1078, 0.0
      %v1085 = vmax.f32 %v1081, 0.0
      %1086 = vst [vmem:[%s229] sm:$0xff] %v1084
      %1087 = vst [vmem:[%s229 + $0x8] sm:$0xff] %v1085
      %s1088 = smul.u32 2, %s16
      %p1089 = scmp.lt.s32.totalorder %s1088, 3
      %s1090 = scalar_select %p1089, %s1088, 3
      %s1091 = smul.addr %s1090, 8
      %s1092 = scalar_lea.vmem %s5, %s1091
      // Predicated region
      $region41: #{audio_block.1} parent=39 // pred_check
        %p1093 = pneg %p144
      $region42: #{audio_block.1} parent=39 // pred_check_branch
        %1095 = sbr.rel (%p1093) target = $region44
      $region43: #{audio_block.1} parent=39 // pred_region
        %s1096 = smul.u32 2, %s16
      $region44: #{audio_block.1} parent=39 // pred_fallthru
        _
    $region40: #{audio_block.1} parent=5 // pred_fallthru
      _
    %p1097 = scmp.le.s32.totalorder 2, %s11
    // Predicated region
    $region45: #{audio_block.1} parent=5 // pred_check
      %p1098 = pneg %p1097
    $region46: #{audio_block.1} parent=5 // pred_check_branch
      %1100 = sbr.rel (%p1098) target = $region48
    $region47: #{audio_block.1} parent=5 // pred_region
      %s1101 = ssub.s32 %s11, 2
      // Predicated region
      $region49: #{audio_block.1} parent=47 // pred_check
        %p1102 = pneg %p150
      $region50: #{audio_block.1} parent=47 // pred_check_branch
        %1104 = sbr.rel (%p1102) target = $region52
      $region51: #{audio_block.1} parent=47 // pred_region
        %s1105 = smul.u32 2, %s17
        %p1106 = scmp.lt.s32.totalorder %s1105, 3
        %s1107 = scalar_select %p1106, %s1105, 3
        %s1108 = smul.addr %s1107, 8
        %s1109 = scalar_lea.vmem %s5, %s1108
      $region52: #{audio_block.1} parent=47 // pred_fallthru
        _
    $region48: #{audio_block.1} parent=5 // pred_fallthru
      _
  $region6: #{audio_block.1} parent=0 // loop_footer
    %s15 = sadd.s32 1, %s11
  $region7: #{audio_block.1} parent=0 // loop_footer_branch
    %10 = sbr.rel target = $region3
  $region8: #{audio_block.1} parent=0 // loop_exit
    _

</llo_original>
